<compile_context>
chip_gen: v6e
topology: v6e:2x2x1
jax: 0.10.0
libtpu: 0.0.40
codegen_flags: <defaults>
</compile_context>

<pallas_src>
import jax
import jax.numpy as jnp
from jax import lax
from jax.experimental import pallas as pl
from jax.experimental.pallas import tpu as pltpu

DROPOUT_P = 0.1
BLOCK_E = 32          # E entries fused per grid step -> (BLOCK_E*Lq, D) output slabs


def attn_kernel(q_ref, k_ref, v_ref, mask_ref, inv_ref, drop_ref, o_ref):
    # q_ref   : (BLOCK_E*Lq, D)   q rows replicated across the E broadcast batch
    # k_ref   : (Lk, D)
    # v_ref   : (Lk, D)
    # mask_ref: (BLOCK_E*Lq, Lk)  0/1 float
    # inv_ref : (BLOCK_E*Lq, 1)   per-row divisor (inv_scale[e] repeated over Lq)
    # drop_ref: (BLOCK_E*Lq, Lk)  dropout multiplier: 0 or 1/(1-p)
    # o_ref   : (BLOCK_E*Lq, D)

    # scores: one well-shaped MXU op per slab; contracting the last dims of q and k
    # avoids materializing k^T.
    s = lax.dot_general(
        q_ref[...], k_ref[...],
        dimension_numbers=(((1,), (1,)), ((), ())),
        preferred_element_type=jnp.float32)                 # (BLOCK_E*Lq, Lk)

    # per-e scale: w = s / inv_scale[e]   (exact divide, vectorized over the slab)
    w = s / inv_ref[...]

    # mask: where(mask, w, -inf)
    w = jnp.where(mask_ref[...] != jnp.float32(0.0), w, jnp.float32(-jnp.inf))

    # softmax over the last (Lk) dim
    w_max = jnp.max(w, axis=-1, keepdims=True)
    p = jnp.exp(w - w_max)
    p = p / jnp.sum(p, axis=-1, keepdims=True)

    # dropout: multiply by precomputed keep-mask (already scaled by 1/(1-p))
    p = p * drop_ref[...]

    # second matmul batched over the whole slab: (BLOCK_E*Lq, Lk) @ (Lk, D)
    o_ref[...] = jnp.dot(p, v_ref[...], preferred_element_type=jnp.float32)


@jax.jit
def model_forward(q, k, v, mask, inv_scale, dropout_key):
    B, Lq, D = q.shape
    Lk = k.shape[1]
    E = inv_scale.size            # inv_scale.view(-1, 1, 1) -> E leading batch entries
    assert B == 1, "reference module is exercised with bsz == 1"

    block_e = min(BLOCK_E, E)
    assert E % block_e == 0
    rows_per_block = block_e * Lq          # 128 for the reference shapes
    n_rows = E * Lq

    q2 = q.reshape(Lq, D).astype(jnp.float32)
    k2 = k.reshape(Lk, D).astype(jnp.float32)
    v2 = v.reshape(Lk, D).astype(jnp.float32)
    mask2 = mask.reshape(Lq, Lk)

    # Layout prep (pure data movement): expand the E-broadcast into dense row slabs.
    q_rows = jnp.tile(q2, (E, 1))                                      # (E*Lq, D)
    mask_rows = jnp.tile(mask2.astype(jnp.float32), (E, 1))            # (E*Lq, Lk)
    inv_rows = jnp.repeat(
        inv_scale.reshape(E).astype(jnp.float32), Lq)[:, None]         # (E*Lq, 1)

    # TODO(synk): dropout RNG drawn with jax.random here (pltpu.prng_* has no
    # CPU/interpret lowering); random realization differs from torch's RNG.
    keep = jax.random.bernoulli(dropout_key, p=1.0 - DROPOUT_P, shape=(n_rows, Lk))
    drop_rows = keep.astype(jnp.float32) * jnp.float32(1.0 / (1.0 - DROPOUT_P))

    out = pl.pallas_call(
        attn_kernel,
        out_shape=jax.ShapeDtypeStruct((n_rows, D), jnp.float32),
        grid=(E // block_e,),
        in_specs=[
            pl.BlockSpec((rows_per_block, D), lambda i: (i, 0)),     # q rows
            pl.BlockSpec((Lk, D), lambda i: (0, 0)),                 # k
            pl.BlockSpec((Lk, D), lambda i: (0, 0)),                 # v
            pl.BlockSpec((rows_per_block, Lk), lambda i: (i, 0)),    # mask rows
            pl.BlockSpec((rows_per_block, 1), lambda i: (i, 0)),     # inv_scale rows
            pl.BlockSpec((rows_per_block, Lk), lambda i: (i, 0)),    # dropout rows
        ],
        out_specs=pl.BlockSpec((rows_per_block, D), lambda i: (i, 0)),
        compiler_params=pltpu.CompilerParams(
            dimension_semantics=("parallel",)),   # disjoint output slabs per step
    )(q_rows, k2, v2, mask_rows, inv_rows, drop_rows)

    return out.reshape(E, Lq, D)


if __name__ == "__main__":
    key = jax.random.PRNGKey(0)
    kq, kk, kv, km, ki, kd = jax.random.split(key, 6)

    # shapes from the reference script
    q = jax.random.normal(kq, (1, 4, 128), jnp.float32)
    k = jax.random.normal(kk, (1, 8, 128), jnp.float32)
    v = jax.random.normal(kv, (1, 8, 128), jnp.float32)
    mask = jax.random.normal(km, (1, 4, 8), jnp.float32) > 0.0   # boolean mask
    inv_scale = jax.random.normal(ki, (1, 128), jnp.float32)

    out = model_forward(q, k, v, mask, inv_scale, kd)
    out = jax.block_until_ready(out)
    assert out.shape == (128, 4, 128) and out.dtype == jnp.float32
    print("KERNEL_OK")
</pallas_src>

<mosaic_0001>
module attributes {stable_mosaic.version = 11 : i64} {
  func.func @attn_kernel(%arg0: i32, %arg1: memref<128x128xf32, #tpu.memory_space<vmem>>, %arg2: memref<8x128xf32, #tpu.memory_space<vmem>>, %arg3: memref<8x128xf32, #tpu.memory_space<vmem>>, %arg4: memref<128x8xf32, #tpu.memory_space<vmem>>, %arg5: memref<128x1xf32, #tpu.memory_space<vmem>>, %arg6: memref<128x8xf32, #tpu.memory_space<vmem>>, %arg7: memref<128x128xf32, #tpu.memory_space<vmem>>) attributes {dimension_semantics = [#tpu.dimension_semantics<parallel>], iteration_bounds = array<i64: 4>, scalar_prefetch = 0 : i64, scratch_operands = 0 : i64, tpu.core_type = #tpu.core_type<tc>, window_params = [{transform_indices = @transform_0, window_bounds = array<i64: 128, 128>}, {pipeline_mode = #tpu.pipeline_mode<synchronous>, transform_indices = @transform_1, window_bounds = array<i64: 8, 128>}, {pipeline_mode = #tpu.pipeline_mode<synchronous>, transform_indices = @transform_2, window_bounds = array<i64: 8, 128>}, {transform_indices = @transform_3, window_bounds = array<i64: 128, 8>}, {transform_indices = @transform_4, window_bounds = array<i64: 128, 1>}, {transform_indices = @transform_5, window_bounds = array<i64: 128, 8>}, {transform_indices = @transform_6, window_bounds = array<i64: 128, 128>}]} {
    %c0 = arith.constant 0 : index
    %c0_0 = arith.constant 0 : index
    %0 = vector.load %arg1[%c0, %c0_0] : memref<128x128xf32, #tpu.memory_space<vmem>>, vector<128x128xf32>
    %c0_1 = arith.constant 0 : index
    %c0_2 = arith.constant 0 : index
    %1 = vector.load %arg2[%c0_1, %c0_2] : memref<8x128xf32, #tpu.memory_space<vmem>>, vector<8x128xf32>
    %cst = arith.constant dense<0.000000e+00> : vector<128x8xf32>
    %2 = tpu.matmul %0, %1, %cst {dimension_numbers = #tpu.dot_dimension_numbers<[1], [1], [0], [0], [0, 0, 1, 0], [], []>} : vector<128x128xf32>, vector<8x128xf32>, vector<128x8xf32> -> vector<128x8xf32>
    %c0_3 = arith.constant 0 : index
    %c0_4 = arith.constant 0 : index
    %3 = vector.load %arg5[%c0_3, %c0_4] : memref<128x1xf32, #tpu.memory_space<vmem>>, vector<128x1xf32>
    %4 = vector.broadcast %3 : vector<128x1xf32> to vector<128x8xf32>
    %5 = arith.divf %2, %4 : vector<128x8xf32>
    %c0_5 = arith.constant 0 : index
    %c0_6 = arith.constant 0 : index
    %6 = vector.load %arg4[%c0_5, %c0_6] : memref<128x8xf32, #tpu.memory_space<vmem>>, vector<128x8xf32>
    %cst_7 = arith.constant 0.000000e+00 : f32
    %7 = vector.broadcast %cst_7 : f32 to vector<128x8xf32>
    %8 = arith.cmpf one, %6, %7 : vector<128x8xf32>
    %cst_8 = arith.constant 0xFF800000 : f32
    %9 = vector.broadcast %cst_8 : f32 to vector<128x8xf32>
    %10 = arith.select %8, %5, %9 : vector<128x8xi1>, vector<128x8xf32>
    %cst_9 = arith.constant dense<0xFF800000> : vector<128xf32>
    %11 = vector.multi_reduction <maximumf>, %10, %cst_9 [1] : vector<128x8xf32> to vector<128xf32>
    %12 = vector.shape_cast %11 : vector<128xf32> to vector<128x1xf32>
    %13 = vector.broadcast %12 : vector<128x1xf32> to vector<128x8xf32>
    %14 = arith.subf %10, %13 : vector<128x8xf32>
    %15 = math.exp %14 : vector<128x8xf32>
    %cst_10 = arith.constant dense<0.000000e+00> : vector<128xf32>
    %16 = vector.multi_reduction <add>, %15, %cst_10 [1] : vector<128x8xf32> to vector<128xf32>
    %17 = vector.shape_cast %16 : vector<128xf32> to vector<128x1xf32>
    %18 = vector.broadcast %17 : vector<128x1xf32> to vector<128x8xf32>
    %19 = arith.divf %15, %18 : vector<128x8xf32>
    %c0_11 = arith.constant 0 : index
    %c0_12 = arith.constant 0 : index
    %20 = vector.load %arg6[%c0_11, %c0_12] : memref<128x8xf32, #tpu.memory_space<vmem>>, vector<128x8xf32>
    %21 = arith.mulf %19, %20 : vector<128x8xf32>
    %c0_13 = arith.constant 0 : index
    %c0_14 = arith.constant 0 : index
    %22 = vector.load %arg3[%c0_13, %c0_14] : memref<8x128xf32, #tpu.memory_space<vmem>>, vector<8x128xf32>
    %cst_15 = arith.constant dense<0.000000e+00> : vector<128x128xf32>
    %23 = tpu.matmul %21, %22, %cst_15 {dimension_numbers = #tpu.dot_dimension_numbers<[1], [0], [0], [1], [0, 0, 1, 1], [], []>} : vector<128x8xf32>, vector<8x128xf32>, vector<128x128xf32> -> vector<128x128xf32>
    %c0_16 = arith.constant 0 : index
    %c0_17 = arith.constant 0 : index
    %24 = vector.load %arg7[%c0_16, %c0_17] : memref<128x128xf32, #tpu.memory_space<vmem>>, vector<128x128xf32>
    tpu.vector_store %arg7[%c0_16, %c0_17], %23 {strides = array<i32>} : memref<128x128xf32, #tpu.memory_space<vmem>>, vector<128x128xf32>,
    return
  }
  func.func @transform_0(%arg0: i32) -> (i32, i32) {
    %c0_i32 = arith.constant 0 : i32
    %c0_i32_0 = arith.constant 0 : i32
    return %arg0, %c0_i32 : i32, i32
  }
  func.func @transform_1(%arg0: i32) -> (i32, i32) {
    %c0_i32 = arith.constant 0 : i32
    %c0_i32_0 = arith.constant 0 : i32
    %c0_i32_1 = arith.constant 0 : i32
    return %c0_i32, %c0_i32_0 : i32, i32
  }
  func.func @transform_2(%arg0: i32) -> (i32, i32) {
    %c0_i32 = arith.constant 0 : i32
    %c0_i32_0 = arith.constant 0 : i32
    %c0_i32_1 = arith.constant 0 : i32
    return %c0_i32, %c0_i32_0 : i32, i32
  }
  func.func @transform_3(%arg0: i32) -> (i32, i32) {
    %c0_i32 = arith.constant 0 : i32
    %c0_i32_0 = arith.constant 0 : i32
    return %arg0, %c0_i32 : i32, i32
  }
  func.func @transform_4(%arg0: i32) -> (i32, i32) {
    %c0_i32 = arith.constant 0 : i32
    %c0_i32_0 = arith.constant 0 : i32
    return %arg0, %c0_i32 : i32, i32
  }
  func.func @transform_5(%arg0: i32) -> (i32, i32) {
    %c0_i32 = arith.constant 0 : i32
    %c0_i32_0 = arith.constant 0 : i32
    return %arg0, %c0_i32 : i32, i32
  }
  func.func @transform_6(%arg0: i32) -> (i32, i32) {
    %c0_i32 = arith.constant 0 : i32
    %c0_i32_0 = arith.constant 0 : i32
    return %arg0, %c0_i32 : i32, i32
  }
}

</mosaic_0001>

<llo_original>
// kernel: model_forward.1
$region0: #{model_forward.1}
  #allocation0 [shape = 'u32[]', space=smem, size = 0x4, offset = 0x4, fixed_abs, tag = 'smem constant byte address 0x4 - core index']
  #allocation1 [shape = 'u32[144,128]{1,0:T(1,128)}', space=vmem, size = 0x12000, scoped, tag = 'internal scratch']
  %s0 = inlined_call_operand.vmem [shape: f32[512,128], index: 0, kind: input, shape index: {}]
  %s1 = inlined_call_operand.vmem [shape: f32[8,128], index: 1, kind: input, shape index: {}]
  %s2 = inlined_call_operand.vmem [shape: f32[8,128], index: 2, kind: input, shape index: {}]
  %s3 = inlined_call_operand.vmem [shape: f32[512,8], index: 3, kind: input, shape index: {}]
  %s4 = inlined_call_operand.vmem [shape: f32[512,1], index: 4, kind: input, shape index: {}]
  %s5 = inlined_call_operand.vmem [shape: f32[512,8], index: 5, kind: input, shape index: {}]
  %s6 = inlined_call_operand.hbm [shape: f32[512,128], index: 6, kind: output, shape index: {}]
  %s7 = sld [smem:[#allocation0]]
  $region57: #{model_forward.1} parent=0
    _
  %s9 = ssub.s32 1, %s7
  %s10 = scalar_select 0, %s9, %s7
  $region1: #{model_forward.1} parent=0
    #allocation2 [shape = 'u8[131072]{0}', space=vmem, size = 0x20000, scoped, tag = 'output window, operand 0']
    #allocation3 [shape = 's32[2]{0}', space=sflag, size = 0x8, scoped, tag = 'scoped memory for model_forward.1']
    %11 = vsyncpa [#allocation3], 0
    %s12 = scalar_lea.sflag [#allocation3], 1
    %13 = vsyncpa %s12, 0
    loop: start=0, step=1, limit=6
    $region2: #{model_forward.1} parent=1 // loop_pre_header
      _
    $region3: #{model_forward.1} parent=1 // loop_header
      %s15 = sphi 0, %s19
      %p16 = scmp.ge.s32.totalorder %s15, 6
      %s25 = sphi 0, %s27
      %s28 = sphi 0, %s25
      %s29 = sphi 0, %s28
      %s45 = sphi 0, %s29
      %s49 = sphi 0, %s49
      %s51 = sphi 0, %s49
      %s52 = sphi 0, %s51
      %s66 = sphi 0, %s52
      %s70 = sphi 0, %s70
      %s72 = sphi 0, %s70
      %s73 = sphi 0, %s72
      %s87 = sphi 0, %s73
      %s93 = sphi 0, %s95
      %s96 = sphi 0, %s93
      %s97 = sphi 0, %s96
      %s113 = sphi 0, %s97
      %s119 = sphi 0, %s121
      %s122 = sphi 0, %s119
      %s123 = sphi 0, %s122
      %s139 = sphi 0, %s123
      %s145 = sphi 0, %s147
      %s148 = sphi 0, %s145
      %s149 = sphi 0, %s148
      %s165 = sphi 0, %s149
      %s171 = sphi 0, %s173
      %s174 = sphi 0, %s171
      %s175 = sphi 0, %s174
      %s191 = sphi 0, %s175
    $region4: #{model_forward.1} parent=1 // loop_header_branch
      %18 = sbr.rel (%p16) target = $region8
    $region5: #{model_forward.1} parent=1 // loop_body
      %s20 = ssub.s32 %s15, 1
      %s21 = ssub.s32 %s15, 2
      %s22 = sadd.s32 %s15, 1
      %s23 = ssub.s32 %s15, %s22
      %p24 = scmp.eq.s32.totalorder %s23, 0
      %s26 = sadd.s32 %s25, 1
      %s27 = scalar_select %p24, %s25, %s26
      %p30 = pneg %p24
      %p31 = scmp.eq.s32.totalorder %s15, 3
      %p32 = por %p30, %p31
      %p33 = scmp.ne.s32.totalorder %s25, %s28
      %p34 = scmp.eq.s32.totalorder %s15, 0
      %p35 = por %p33, %p34
      %p36 = scmp.ne.s32.totalorder %s25, %s28
      %p37 = scmp.eq.s32.totalorder %s20, 3
      %p38 = por %p36, %p37
      %p39 = scmp.ne.s32.totalorder %s28, %s29
      %p40 = scmp.eq.s32.totalorder %s20, 0
      %p41 = por %p39, %p40
      %p42 = scmp.ne.s32.totalorder %s28, %s29
      %p43 = scmp.eq.s32.totalorder %s21, 3
      %p44 = por %p42, %p43
      %p46 = scmp.ne.s32.totalorder %s29, %s45
      %p47 = scmp.eq.s32.totalorder %s21, 0
      %p48 = por %p46, %p47
      %s50 = sadd.s32 %s49, 1
      %p53 = scmp.eq.s32.totalorder %s15, 3
      %p54 = scmp.ne.s32.totalorder %s49, %s51
      %p55 = scmp.eq.s32.totalorder %s15, 0
      %p56 = por %p54, %p55
      %p57 = scmp.ne.s32.totalorder %s49, %s51
      %p58 = scmp.eq.s32.totalorder %s20, 3
      %p59 = por %p57, %p58
      %p60 = scmp.ne.s32.totalorder %s51, %s52
      %p61 = scmp.eq.s32.totalorder %s20, 0
      %p62 = por %p60, %p61
      %p63 = scmp.ne.s32.totalorder %s51, %s52
      %p64 = scmp.eq.s32.totalorder %s21, 3
      %p65 = por %p63, %p64
      %p67 = scmp.ne.s32.totalorder %s52, %s66
      %p68 = scmp.eq.s32.totalorder %s21, 0
      %p69 = por %p67, %p68
      %s71 = sadd.s32 %s70, 1
      %p74 = scmp.eq.s32.totalorder %s15, 3
      %p75 = scmp.ne.s32.totalorder %s70, %s72
      %p76 = scmp.eq.s32.totalorder %s15, 0
      %p77 = por %p75, %p76
      %p78 = scmp.ne.s32.totalorder %s70, %s72
      %p79 = scmp.eq.s32.totalorder %s20, 3
      %p80 = por %p78, %p79
      %p81 = scmp.ne.s32.totalorder %s72, %s73
      %p82 = scmp.eq.s32.totalorder %s20, 0
      %p83 = por %p81, %p82
      %p84 = scmp.ne.s32.totalorder %s72, %s73
      %p85 = scmp.eq.s32.totalorder %s21, 3
      %p86 = por %p84, %p85
      %p88 = scmp.ne.s32.totalorder %s73, %s87
      %p89 = scmp.eq.s32.totalorder %s21, 0
      %p90 = por %p88, %p89
      %s91 = ssub.s32 %s15, %s22
      %p92 = scmp.eq.s32.totalorder %s91, 0
      %s94 = sadd.s32 %s93, 1
      %s95 = scalar_select %p92, %s93, %s94
      %p98 = pneg %p92
      %p99 = scmp.eq.s32.totalorder %s15, 3
      %p100 = por %p98, %p99
      %p101 = scmp.ne.s32.totalorder %s93, %s96
      %p102 = scmp.eq.s32.totalorder %s15, 0
      %p103 = por %p101, %p102
      %p104 = scmp.ne.s32.totalorder %s93, %s96
      %p105 = scmp.eq.s32.totalorder %s20, 3
      %p106 = por %p104, %p105
      %p107 = scmp.ne.s32.totalorder %s96, %s97
      %p108 = scmp.eq.s32.totalorder %s20, 0
      %p109 = por %p107, %p108
      %p110 = scmp.ne.s32.totalorder %s96, %s97
      %p111 = scmp.eq.s32.totalorder %s21, 3
      %p112 = por %p110, %p111
      %p114 = scmp.ne.s32.totalorder %s97, %s113
      %p115 = scmp.eq.s32.totalorder %s21, 0
      %p116 = por %p114, %p115
      %s117 = ssub.s32 %s15, %s22
      %p118 = scmp.eq.s32.totalorder %s117, 0
      %s120 = sadd.s32 %s119, 1
      %s121 = scalar_select %p118, %s119, %s120
      %p124 = pneg %p118
      %p125 = scmp.eq.s32.totalorder %s15, 3
      %p126 = por %p124, %p125
      %p127 = scmp.ne.s32.totalorder %s119, %s122
      %p128 = scmp.eq.s32.totalorder %s15, 0
      %p129 = por %p127, %p128
      %p130 = scmp.ne.s32.totalorder %s119, %s122
      %p131 = scmp.eq.s32.totalorder %s20, 3
      %p132 = por %p130, %p131
      %p133 = scmp.ne.s32.totalorder %s122, %s123
      %p134 = scmp.eq.s32.totalorder %s20, 0
      %p135 = por %p133, %p134
      %p136 = scmp.ne.s32.totalorder %s122, %s123
      %p137 = scmp.eq.s32.totalorder %s21, 3
      %p138 = por %p136, %p137
      %p140 = scmp.ne.s32.totalorder %s123, %s139
      %p141 = scmp.eq.s32.totalorder %s21, 0
      %p142 = por %p140, %p141
      %s143 = ssub.s32 %s15, %s22
      %p144 = scmp.eq.s32.totalorder %s143, 0
      %s146 = sadd.s32 %s145, 1
      %s147 = scalar_select %p144, %s145, %s146
      %p150 = pneg %p144
      %p151 = scmp.eq.s32.totalorder %s15, 3
      %p152 = por %p150, %p151
      %p153 = scmp.ne.s32.totalorder %s145, %s148
      %p154 = scmp.eq.s32.totalorder %s15, 0
      %p155 = por %p153, %p154
      %p156 = scmp.ne.s32.totalorder %s145, %s148
      %p157 = scmp.eq.s32.totalorder %s20, 3
      %p158 = por %p156, %p157
      %p159 = scmp.ne.s32.totalorder %s148, %s149
      %p160 = scmp.eq.s32.totalorder %s20, 0
      %p161 = por %p159, %p160
      %p162 = scmp.ne.s32.totalorder %s148, %s149
      %p163 = scmp.eq.s32.totalorder %s21, 3
      %p164 = por %p162, %p163
      %p166 = scmp.ne.s32.totalorder %s149, %s165
      %p167 = scmp.eq.s32.totalorder %s21, 0
      %p168 = por %p166, %p167
      %s169 = ssub.s32 %s15, %s22
      %p170 = scmp.eq.s32.totalorder %s169, 0
      %s172 = sadd.s32 %s171, 1
      %s173 = scalar_select %p170, %s171, %s172
      %p176 = pneg %p170
      %p177 = scmp.eq.s32.totalorder %s15, 3
      %p178 = por %p176, %p177
      %p179 = scmp.ne.s32.totalorder %s171, %s174
      %p180 = scmp.eq.s32.totalorder %s15, 0
      %p181 = por %p179, %p180
      %p182 = scmp.ne.s32.totalorder %s171, %s174
      %p183 = scmp.eq.s32.totalorder %s20, 3
      %p184 = por %p182, %p183
      %p185 = scmp.ne.s32.totalorder %s174, %s175
      %p186 = scmp.eq.s32.totalorder %s20, 0
      %p187 = por %p185, %p186
      %p188 = scmp.ne.s32.totalorder %s174, %s175
      %p189 = scmp.eq.s32.totalorder %s21, 3
      %p190 = por %p188, %p189
      %p192 = scmp.ne.s32.totalorder %s175, %s191
      %p193 = scmp.eq.s32.totalorder %s21, 0
      %p194 = por %p192, %p193
      %p195 = scmp.le.s32.totalorder 1, %s15
      %p196 = scmp.lt.s32.totalorder %s15, 5
      %p197 = pnand %p195, %p196
      %p198 = pneg %p197
      // Predicated region
      $region9: #{model_forward.1} parent=5 // pred_check
        _
      $region10: #{model_forward.1} parent=5 // pred_check_branch
        %200 = sbr.rel (%p197) target = $region12
      $region11: #{model_forward.1} parent=5 // pred_region
        %s201 = ssub.s32 %s15, 1
        // Predicated region
        $region13: #{model_forward.1} parent=11 // pred_check
          %p202 = pneg %p62
        $region14: #{model_forward.1} parent=11 // pred_check_branch
          %204 = sbr.rel (%p202) target = $region16
        $region15: #{model_forward.1} parent=11 // pred_region
          _
        $region16: #{model_forward.1} parent=11 // pred_fallthru
          _
        // Predicated region
        $region17: #{model_forward.1} parent=11 // pred_check
          %p205 = pneg %p83
        $region18: #{model_forward.1} parent=11 // pred_check_branch
          %207 = sbr.rel (%p205) target = $region20
        $region19: #{model_forward.1} parent=11 // pred_region
          _
        $region20: #{model_forward.1} parent=11 // pred_fallthru
          _
      $region12: #{model_forward.1} parent=5 // pred_fallthru
        _
      %p208 = scmp.lt.s32.totalorder %s15, 4
      // Predicated region
      $region21: #{model_forward.1} parent=5 // pred_check
        %p209 = pneg %p208
      $region22: #{model_forward.1} parent=5 // pred_check_branch
        %211 = sbr.rel (%p209) target = $region24
      $region23: #{model_forward.1} parent=5 // pred_region
        // Predicated region
        $region25: #{model_forward.1} parent=23 // pred_check
          %p212 = pneg %p35
        $region26: #{model_forward.1} parent=23 // pred_check_branch
          %214 = sbr.rel (%p212) target = $region28
        $region27: #{model_forward.1} parent=23 // pred_region
          %s215 = smul.u32 16, %s15
          %p216 = scmp.lt.s32.totalorder %s215, 63
          %s217 = scalar_select %p216, %s215, 63
          %s218 = smul.addr %s217, 8
          %s219 = scalar_lea.vmem %s0, %s218
          %s220 = smul.u32 16, %s15
        $region28: #{model_forward.1} parent=23 // pred_fallthru
          _
        // Predicated region
        $region29: #{model_forward.1} parent=23 // pred_check
          %p221 = pneg %p103
        $region30: #{model_forward.1} parent=23 // pred_check_branch
          %223 = sbr.rel (%p221) target = $region32
        $region31: #{model_forward.1} parent=23 // pred_region
          %s224 = smul.u32 16, %s15
          %p225 = scmp.lt.s32.totalorder %s224, 63
          %s226 = scalar_select %p225, %s224, 63
          %s227 = smul.addr %s226, 8
          %s228 = scalar_lea.vmem %s3, %s227
          %s229 = smul.u32 16, %s15
        $region32: #{model_forward.1} parent=23 // pred_fallthru
          _
        // Predicated region
        $region33: #{model_forward.1} parent=23 // pred_check
          %p230 = pneg %p129
        $region34: #{model_forward.1} parent=23 // pred_check_branch
          %232 = sbr.rel (%p230) target = $region36
        $region35: #{model_forward.1} parent=23 // pred_region
          %s233 = smul.u32 16, %s15
          %p234 = scmp.lt.s32.totalorder %s233, 63
          %s235 = scalar_select %p234, %s233, 63
          %s236 = smul.addr %s235, 8
          %s237 = scalar_lea.vmem %s4, %s236
          %s238 = smul.u32 16, %s15
        $region36: #{model_forward.1} parent=23 // pred_fallthru
          _
        // Predicated region
        $region37: #{model_forward.1} parent=23 // pred_check
          %p239 = pneg %p155
        $region38: #{model_forward.1} parent=23 // pred_check_branch
          %241 = sbr.rel (%p239) target = $region40
        $region39: #{model_forward.1} parent=23 // pred_region
          %s242 = smul.u32 16, %s15
          %p243 = scmp.lt.s32.totalorder %s242, 63
          %s244 = scalar_select %p243, %s242, 63
          %s245 = smul.addr %s244, 8
          %s246 = scalar_lea.vmem %s5, %s245
          %s247 = smul.u32 16, %s15
        $region40: #{model_forward.1} parent=23 // pred_fallthru
          _
      $region24: #{model_forward.1} parent=5 // pred_fallthru
        _
      %p248 = scmp.le.s32.totalorder 1, %s15
      %p249 = scmp.lt.s32.totalorder %s15, 5
      %p250 = pnand %p248, %p249
      %p251 = pneg %p250
      // Predicated region
      $region41: #{model_forward.1} parent=5 // pred_check
        _
      $region42: #{model_forward.1} parent=5 // pred_check_branch
        %253 = sbr.rel (%p250) target = $region44
      $region43: #{model_forward.1} parent=5 // pred_region
        %s254 = ssub.s32 %s15, 1
        %s255 = smul.u32 16, %s20
        %p256 = scmp.lt.s32.totalorder %s255, 63
        %s257 = scalar_select %p256, %s255, 63
        %s258 = smul.addr %s257, 8
        %s259 = scalar_lea.vmem %s0, %s258
        %p260 = pneg %p41
        %p261 = pneg %p38
        %p262 = pneg %p62
        %p263 = pneg %p59
        %p264 = pneg %p83
        %p265 = pneg %p80
        %s266 = smul.u32 16, %s20
        %p267 = scmp.lt.s32.totalorder %s266, 63
        %s268 = scalar_select %p267, %s266, 63
        %s269 = smul.addr %s268, 8
        %s270 = scalar_lea.vmem %s3, %s269
        %p271 = pneg %p109
        %p272 = pneg %p106
        %s273 = smul.u32 16, %s20
        %p274 = scmp.lt.s32.totalorder %s273, 63
        %s275 = scalar_select %p274, %s273, 63
        %s276 = smul.addr %s275, 8
        %s277 = scalar_lea.vmem %s4, %s276
        %p278 = pneg %p135
        %p279 = pneg %p132
        %s280 = smul.u32 16, %s20
        %p281 = scmp.lt.s32.totalorder %s280, 63
        %s282 = scalar_select %p281, %s280, 63
        %s283 = smul.addr %s282, 8
        %s284 = scalar_lea.vmem %s5, %s283
        %p285 = pneg %p161
        %p286 = pneg %p158
        %p287 = pneg %p187
        %p288 = pneg %p184
        %s289 = sand.u32 %s174, 1
        %s290 = scalar_lea.sflag [#allocation3], %s289
        %s291 = sand.u32 %s174, 1
        %s292 = smul.addr %s291, 128
        %s293 = scalar_lea.vmem [#allocation2], %s292
        %s294 = smul.u32 16, %s20
        %p295 = scmp.lt.s32.totalorder %s294, 63
        %s296 = scalar_select %p295, %s294, 63
        %s297 = smul.addr %s296, 8
        %s298 = scalar_lea.vmem %s0, %s297
        %s299 = smul.u32 16, %s20
        %s300 = smul.u32 16, %s20
        %p301 = scmp.lt.s32.totalorder %s300, 63
        %s302 = scalar_select %p301, %s300, 63
        %s303 = smul.addr %s302, 8
        %s304 = scalar_lea.vmem %s3, %s303
        %s305 = smul.u32 16, %s20
        %s306 = smul.u32 16, %s20
        %p307 = scmp.lt.s32.totalorder %s306, 63
        %s308 = scalar_select %p307, %s306, 63
        %s309 = smul.addr %s308, 8
        %s310 = scalar_lea.vmem %s4, %s309
        %s311 = smul.u32 16, %s20
        %s312 = smul.u32 16, %s20
        %p313 = scmp.lt.s32.totalorder %s312, 63
        %s314 = scalar_select %p313, %s312, 63
        %s315 = smul.addr %s314, 8
        %s316 = scalar_lea.vmem %s5, %s315
        %s317 = smul.u32 16, %s20
        %s318 = smul.u32 16, %s20
        %v319 = vld [vmem:[%s298] sm:$0xff]
        %v320 = vld [vmem:[%s298 + $0x8] sm:$0xff]
        %v321 = vld [vmem:[%s298 + $0x10] sm:$0xff]
        %v322 = vld [vmem:[%s298 + $0x18] sm:$0xff]
        %v323 = vld [vmem:[%s298 + $0x20] sm:$0xff]
        %v324 = vld [vmem:[%s298 + $0x28] sm:$0xff]
        %v325 = vld [vmem:[%s298 + $0x30] sm:$0xff]
        %v326 = vld [vmem:[%s298 + $0x38] sm:$0xff]
        %v327 = vld [vmem:[%s298 + $0x40] sm:$0xff]
        %v328 = vld [vmem:[%s298 + $0x48] sm:$0xff]
        %v329 = vld [vmem:[%s298 + $0x50] sm:$0xff]
        %v330 = vld [vmem:[%s298 + $0x58] sm:$0xff]
        %v331 = vld [vmem:[%s298 + $0x60] sm:$0xff]
        %v332 = vld [vmem:[%s298 + $0x68] sm:$0xff]
        %v333 = vld [vmem:[%s298 + $0x70] sm:$0xff]
        %v334 = vld [vmem:[%s298 + $0x78] sm:$0xff]
        %v335 = vld [vmem:[%s1] sm:$0xff]
        %336 = vmatprep.subr.mxu0 0.0
        %337 = vmatpush1.xpose.msra.mxu0 0.0
        %338 = vmatprep.subr.mxu0 0.0
        %339 = vmatpush1.xpose.msra.mxu0 0.0
        %340 = vmatprep.subr.mxu0 0.0
        %341 = vmatpush1.xpose.msra.mxu0 0.0
        %342 = vmatprep.subr.mxu0 0.0
        %343 = vmatpush1.xpose.msra.mxu0 0.0
        %344 = vmatprep.subr.mxu0 0.0
        %345 = vmatpush1.xpose.msra.mxu0 0.0
        %346 = vmatprep.subr.mxu0 0.0
        %347 = vmatpush1.xpose.msra.mxu0 0.0
        %348 = vmatprep.subr.mxu0 0.0
        %349 = vmatpush1.xpose.msra.mxu0 0.0
        %350 = vmatprep.subr.mxu0 0.0
        %351 = vmatpush1.xpose.msra.mxu0 0.0
        %352 = vmatprep.subr.mxu0 0.0
        %353 = vmatpush1.xpose.msra.mxu0 0.0
        %354 = vmatprep.subr.mxu0 0.0
        %355 = vmatpush1.xpose.msra.mxu0 0.0
        %356 = vmatprep.subr.mxu0 0.0
        %357 = vmatpush1.xpose.msra.mxu0 0.0
        %358 = vmatprep.subr.mxu0 0.0
        %359 = vmatpush1.xpose.msra.mxu0 0.0
        %360 = vmatprep.subr.mxu0 0.0
        %361 = vmatpush1.xpose.msra.mxu0 0.0
        %362 = vmatprep.subr.mxu0 0.0
        %363 = vmatpush1.xpose.msra.mxu0 0.0
        %364 = vmatprep.subr.mxu0 0.0
        %365 = vmatpush1.xpose.msra.mxu0 0.0
        %366 = vmatprep.subr.mxu0 0.0
        %367 = vmatpush1.xpose.msra.mxu0 %v335
        %368 = vmatprep.subr.mxu0 0.0
        %369 = vmatpush2.xpose.msra.mxu0 0.0
        %370 = vmatprep.subr.mxu0 0.0
        %371 = vmatpush2.xpose.msra.mxu0 0.0
        %372 = vmatprep.subr.mxu0 0.0
        %373 = vmatpush2.xpose.msra.mxu0 0.0
        %374 = vmatprep.subr.mxu0 0.0
        %375 = vmatpush2.xpose.msra.mxu0 0.0
        %376 = vmatprep.subr.mxu0 0.0
        %377 = vmatpush2.xpose.msra.mxu0 0.0
        %378 = vmatprep.subr.mxu0 0.0
        %379 = vmatpush2.xpose.msra.mxu0 0.0
        %380 = vmatprep.subr.mxu0 0.0
        %381 = vmatpush2.xpose.msra.mxu0 0.0
        %382 = vmatprep.subr.mxu0 0.0
        %383 = vmatpush2.xpose.msra.mxu0 0.0
        %384 = vmatprep.subr.mxu0 0.0
        %385 = vmatpush2.xpose.msra.mxu0 0.0
        %386 = vmatprep.subr.mxu0 0.0
        %387 = vmatpush2.xpose.msra.mxu0 0.0
        %388 = vmatprep.subr.mxu0 0.0
        %389 = vmatpush2.xpose.msra.mxu0 0.0
        %390 = vmatprep.subr.mxu0 0.0
        %391 = vmatpush2.xpose.msra.mxu0 0.0
        %392 = vmatprep.subr.mxu0 0.0
        %393 = vmatpush2.xpose.msra.mxu0 0.0
        %394 = vmatprep.subr.mxu0 0.0
        %395 = vmatpush2.xpose.msra.mxu0 0.0
        %396 = vmatprep.subr.mxu0 0.0
        %397 = vmatpush2.xpose.msra.mxu0 0.0
        %398 = vmatprep.subr.mxu0 0.0
        %399 = vmatpush2.xpose.msra.mxu0 0.0
        %400 = vmatprep.mubr.f32.mxu0 0.0
        %401 = vmatmul.mubr.f32.gmra.mxu0 %v319
        %v402 = vpop.f32.mrf.mxu0
        %v403 = vadd.f32 0.0, %v402
        %v404 = vpop.f32.mrf.mxu0
        %405 = vmatprep.mubr.f32.mxu0 0.0
        %406 = vmatmul.mubr.f32.gmra.mxu0 %v320
        %v407 = vpop.f32.mrf.mxu0
        %v408 = vadd.f32 0.0, %v407
        %v409 = vpop.f32.mrf.mxu0
        %410 = vmatprep.mubr.f32.mxu0 0.0
        %411 = vmatmul.mubr.f32.gmra.mxu0 %v321
        %v412 = vpop.f32.mrf.mxu0
        %v413 = vadd.f32 0.0, %v412
        %v414 = vpop.f32.mrf.mxu0
        %415 = vmatprep.mubr.f32.mxu0 0.0
        %416 = vmatmul.mubr.f32.gmra.mxu0 %v322
        %v417 = vpop.f32.mrf.mxu0
        %v418 = vadd.f32 0.0, %v417
        %v419 = vpop.f32.mrf.mxu0
        %420 = vmatprep.mubr.f32.mxu0 0.0
        %421 = vmatmul.mubr.f32.gmra.mxu0 %v323
        %v422 = vpop.f32.mrf.mxu0
        %v423 = vadd.f32 0.0, %v422
        %v424 = vpop.f32.mrf.mxu0
        %425 = vmatprep.mubr.f32.mxu0 0.0
        %426 = vmatmul.mubr.f32.gmra.mxu0 %v324
        %v427 = vpop.f32.mrf.mxu0
        %v428 = vadd.f32 0.0, %v427
        %v429 = vpop.f32.mrf.mxu0
        %430 = vmatprep.mubr.f32.mxu0 0.0
        %431 = vmatmul.mubr.f32.gmra.mxu0 %v325
        %v432 = vpop.f32.mrf.mxu0
        %v433 = vadd.f32 0.0, %v432
        %v434 = vpop.f32.mrf.mxu0
        %435 = vmatprep.mubr.f32.mxu0 0.0
        %436 = vmatmul.mubr.f32.gmra.mxu0 %v326
        %v437 = vpop.f32.mrf.mxu0
        %v438 = vadd.f32 0.0, %v437
        %v439 = vpop.f32.mrf.mxu0
        %440 = vmatprep.mubr.f32.mxu0 0.0
        %441 = vmatmul.mubr.f32.gmra.mxu0 %v327
        %v442 = vpop.f32.mrf.mxu0
        %v443 = vadd.f32 0.0, %v442
        %v444 = vpop.f32.mrf.mxu0
        %445 = vmatprep.mubr.f32.mxu0 0.0
        %446 = vmatmul.mubr.f32.gmra.mxu0 %v328
        %v447 = vpop.f32.mrf.mxu0
        %v448 = vadd.f32 0.0, %v447
        %v449 = vpop.f32.mrf.mxu0
        %450 = vmatprep.mubr.f32.mxu0 0.0
        %451 = vmatmul.mubr.f32.gmra.mxu0 %v329
        %v452 = vpop.f32.mrf.mxu0
        %v453 = vadd.f32 0.0, %v452
        %v454 = vpop.f32.mrf.mxu0
        %455 = vmatprep.mubr.f32.mxu0 0.0
        %456 = vmatmul.mubr.f32.gmra.mxu0 %v330
        %v457 = vpop.f32.mrf.mxu0
        %v458 = vadd.f32 0.0, %v457
        %v459 = vpop.f32.mrf.mxu0
        %460 = vmatprep.mubr.f32.mxu0 0.0
        %461 = vmatmul.mubr.f32.gmra.mxu0 %v331
        %v462 = vpop.f32.mrf.mxu0
        %v463 = vadd.f32 0.0, %v462
        %v464 = vpop.f32.mrf.mxu0
        %465 = vmatprep.mubr.f32.mxu0 0.0
        %466 = vmatmul.mubr.f32.gmra.mxu0 %v332
        %v467 = vpop.f32.mrf.mxu0
        %v468 = vadd.f32 0.0, %v467
        %v469 = vpop.f32.mrf.mxu0
        %470 = vmatprep.mubr.f32.mxu0 0.0
        %471 = vmatmul.mubr.f32.gmra.mxu0 %v333
        %v472 = vpop.f32.mrf.mxu0
        %v473 = vadd.f32 0.0, %v472
        %v474 = vpop.f32.mrf.mxu0
        %475 = vmatprep.mubr.f32.mxu0 0.0
        %476 = vmatmul.mubr.f32.gmra.mxu0 %v334
        %v477 = vpop.f32.mrf.mxu0
        %v478 = vadd.f32 0.0, %v477
        %v479 = vpop.f32.mrf.mxu0
        %480 = vdwg.mxu0
        %v481 = vld [vmem:[%s310] sm:$0xff]
        %v482 = vld [vmem:[%s310 + $0x8] sm:$0xff]
        %v483 = vld [vmem:[%s310 + $0x10] sm:$0xff]
        %v484 = vld [vmem:[%s310 + $0x18] sm:$0xff]
        %v485 = vld [vmem:[%s310 + $0x20] sm:$0xff]
        %v486 = vld [vmem:[%s310 + $0x28] sm:$0xff]
        %v487 = vld [vmem:[%s310 + $0x30] sm:$0xff]
        %v488 = vld [vmem:[%s310 + $0x38] sm:$0xff]
        %v489 = vld [vmem:[%s310 + $0x40] sm:$0xff]
        %v490 = vld [vmem:[%s310 + $0x48] sm:$0xff]
        %v491 = vld [vmem:[%s310 + $0x50] sm:$0xff]
        %v492 = vld [vmem:[%s310 + $0x58] sm:$0xff]
        %v493 = vld [vmem:[%s310 + $0x60] sm:$0xff]
        %v494 = vld [vmem:[%s310 + $0x68] sm:$0xff]
        %v495 = vld [vmem:[%s310 + $0x70] sm:$0xff]
        %v496 = vld [vmem:[%s310 + $0x78] sm:$0xff]
        %498 = vset.pattern.permute.xlu0 0
        %499 = vperm.xlu0 %498, %v481
        %v500 = vpop.permute.xlu0 %499
        %503 = vset.pattern.permute.xlu0 0
        %504 = vperm.xlu0 %503, %v482
        %v505 = vpop.permute.xlu0 %504
        %508 = vset.pattern.permute.xlu0 0
        %509 = vperm.xlu0 %508, %v483
        %v510 = vpop.permute.xlu0 %509
        %513 = vset.pattern.permute.xlu0 0
        %514 = vperm.xlu0 %513, %v484
        %v515 = vpop.permute.xlu0 %514
        %518 = vset.pattern.permute.xlu0 0
        %519 = vperm.xlu0 %518, %v485
        %v520 = vpop.permute.xlu0 %519
        %523 = vset.pattern.permute.xlu0 0
        %524 = vperm.xlu0 %523, %v486
        %v525 = vpop.permute.xlu0 %524
        %528 = vset.pattern.permute.xlu0 0
        %529 = vperm.xlu0 %528, %v487
        %v530 = vpop.permute.xlu0 %529
        %533 = vset.pattern.permute.xlu0 0
        %534 = vperm.xlu0 %533, %v488
        %v535 = vpop.permute.xlu0 %534
        %538 = vset.pattern.permute.xlu0 0
        %539 = vperm.xlu0 %538, %v489
        %v540 = vpop.permute.xlu0 %539
        %543 = vset.pattern.permute.xlu0 0
        %544 = vperm.xlu0 %543, %v490
        %v545 = vpop.permute.xlu0 %544
        %548 = vset.pattern.permute.xlu0 0
        %549 = vperm.xlu0 %548, %v491
        %v550 = vpop.permute.xlu0 %549
        %553 = vset.pattern.permute.xlu0 0
        %554 = vperm.xlu0 %553, %v492
        %v555 = vpop.permute.xlu0 %554
        %558 = vset.pattern.permute.xlu0 0
        %559 = vperm.xlu0 %558, %v493
        %v560 = vpop.permute.xlu0 %559
        %563 = vset.pattern.permute.xlu0 0
        %564 = vperm.xlu0 %563, %v494
        %v565 = vpop.permute.xlu0 %564
        %568 = vset.pattern.permute.xlu0 0
        %569 = vperm.xlu0 %568, %v495
        %v570 = vpop.permute.xlu0 %569
        %573 = vset.pattern.permute.xlu0 0
        %574 = vperm.xlu0 %573, %v496
        %v575 = vpop.permute.xlu0 %574
        %v577 = vrcp.pop %v500
        %v578 = vmul.f32 %v403, %v577
        %v579 = vrcp.pop %v505
        %v580 = vmul.f32 %v408, %v579
        %v581 = vrcp.pop %v510
        %v582 = vmul.f32 %v413, %v581
        %v583 = vrcp.pop %v515
        %v584 = vmul.f32 %v418, %v583
        %v585 = vrcp.pop %v520
        %v586 = vmul.f32 %v423, %v585
        %v587 = vrcp.pop %v525
        %v588 = vmul.f32 %v428, %v587
        %v589 = vrcp.pop %v530
        %v590 = vmul.f32 %v433, %v589
        %v591 = vrcp.pop %v535
        %v592 = vmul.f32 %v438, %v591
        %v593 = vrcp.pop %v540
        %v594 = vmul.f32 %v443, %v593
        %v595 = vrcp.pop %v545
        %v596 = vmul.f32 %v448, %v595
        %v597 = vrcp.pop %v550
        %v598 = vmul.f32 %v453, %v597
        %v599 = vrcp.pop %v555
        %v600 = vmul.f32 %v458, %v599
        %v601 = vrcp.pop %v560
        %v602 = vmul.f32 %v463, %v601
        %v603 = vrcp.pop %v565
        %v604 = vmul.f32 %v468, %v603
        %v605 = vrcp.pop %v570
        %v606 = vmul.f32 %v473, %v605
        %v607 = vrcp.pop %v575
        %v608 = vmul.f32 %v478, %v607
        %v609 = vld [vmem:[%s304] sm:$0xff]
        %v610 = vld [vmem:[%s304 + $0x8] sm:$0xff]
        %v611 = vld [vmem:[%s304 + $0x10] sm:$0xff]
        %v612 = vld [vmem:[%s304 + $0x18] sm:$0xff]
        %v613 = vld [vmem:[%s304 + $0x20] sm:$0xff]
        %v614 = vld [vmem:[%s304 + $0x28] sm:$0xff]
        %v615 = vld [vmem:[%s304 + $0x30] sm:$0xff]
        %v616 = vld [vmem:[%s304 + $0x38] sm:$0xff]
        %v617 = vld [vmem:[%s304 + $0x40] sm:$0xff]
        %v618 = vld [vmem:[%s304 + $0x48] sm:$0xff]
        %v619 = vld [vmem:[%s304 + $0x50] sm:$0xff]
        %v620 = vld [vmem:[%s304 + $0x58] sm:$0xff]
        %v621 = vld [vmem:[%s304 + $0x60] sm:$0xff]
        %v622 = vld [vmem:[%s304 + $0x68] sm:$0xff]
        %v623 = vld [vmem:[%s304 + $0x70] sm:$0xff]
        %v624 = vld [vmem:[%s304 + $0x78] sm:$0xff]
        %vm625 = vcmp.ne.f32.partialorder %v609, 0.0
        %vm626 = vcmp.ne.f32.partialorder %v610, 0.0
        %vm627 = vcmp.ne.f32.partialorder %v611, 0.0
        %vm628 = vcmp.ne.f32.partialorder %v612, 0.0
        %vm629 = vcmp.ne.f32.partialorder %v613, 0.0
        %vm630 = vcmp.ne.f32.partialorder %v614, 0.0
        %vm631 = vcmp.ne.f32.partialorder %v615, 0.0
        %vm632 = vcmp.ne.f32.partialorder %v616, 0.0
        %vm633 = vcmp.ne.f32.partialorder %v617, 0.0
        %vm634 = vcmp.ne.f32.partialorder %v618, 0.0
        %vm635 = vcmp.ne.f32.partialorder %v619, 0.0
        %vm636 = vcmp.ne.f32.partialorder %v620, 0.0
        %vm637 = vcmp.ne.f32.partialorder %v621, 0.0
        %vm638 = vcmp.ne.f32.partialorder %v622, 0.0
        %vm639 = vcmp.ne.f32.partialorder %v623, 0.0
        %vm640 = vcmp.ne.f32.partialorder %v624, 0.0
        %v641 = vsel %vm625, %v578, -inf
        %v642 = vsel %vm626, %v580, -inf
        %v643 = vsel %vm627, %v582, -inf
        %v644 = vsel %vm628, %v584, -inf
        %v645 = vsel %vm629, %v586, -inf
        %v646 = vsel %vm630, %v588, -inf
        %v647 = vsel %vm631, %v590, -inf
        %v648 = vsel %vm632, %v592, -inf
        %v649 = vsel %vm633, %v594, -inf
        %v650 = vsel %vm634, %v596, -inf
        %v651 = vsel %vm635, %v598, -inf
        %v652 = vsel %vm636, %v600, -inf
        %v653 = vsel %vm637, %v602, -inf
        %v654 = vsel %vm638, %v604, -inf
        %v655 = vsel %vm639, %v606, -inf
        %v656 = vsel %vm640, %v608, -inf
        %vm657 = vcmask 64512
        %v658 = vsel %vm657, %v641, -inf
        %659 = vmax.xlane.f32.xlu0 %v658
        %v660 = vpop.xlane.xlu0 %659
        %v661 = vsel %vm657, %v642, -inf
        %662 = vmax.xlane.f32.xlu0 %v661
        %v663 = vpop.xlane.xlu0 %662
        %v664 = vsel %vm657, %v643, -inf
        %665 = vmax.xlane.f32.xlu0 %v664
        %v666 = vpop.xlane.xlu0 %665
        %v667 = vsel %vm657, %v644, -inf
        %668 = vmax.xlane.f32.xlu0 %v667
        %v669 = vpop.xlane.xlu0 %668
        %v670 = vsel %vm657, %v645, -inf
        %671 = vmax.xlane.f32.xlu0 %v670
        %v672 = vpop.xlane.xlu0 %671
        %v673 = vsel %vm657, %v646, -inf
        %674 = vmax.xlane.f32.xlu0 %v673
        %v675 = vpop.xlane.xlu0 %674
        %v676 = vsel %vm657, %v647, -inf
        %677 = vmax.xlane.f32.xlu0 %v676
        %v678 = vpop.xlane.xlu0 %677
        %v679 = vsel %vm657, %v648, -inf
        %680 = vmax.xlane.f32.xlu0 %v679
        %v681 = vpop.xlane.xlu0 %680
        %v682 = vsel %vm657, %v649, -inf
        %683 = vmax.xlane.f32.xlu0 %v682
        %v684 = vpop.xlane.xlu0 %683
        %v685 = vsel %vm657, %v650, -inf
        %686 = vmax.xlane.f32.xlu0 %v685
        %v687 = vpop.xlane.xlu0 %686
        %v688 = vsel %vm657, %v651, -inf
        %689 = vmax.xlane.f32.xlu0 %v688
        %v690 = vpop.xlane.xlu0 %689
        %v691 = vsel %vm657, %v652, -inf
        %692 = vmax.xlane.f32.xlu0 %v691
        %v693 = vpop.xlane.xlu0 %692
        %v694 = vsel %vm657, %v653, -inf
        %695 = vmax.xlane.f32.xlu0 %v694
        %v696 = vpop.xlane.xlu0 %695
        %v697 = vsel %vm657, %v654, -inf
        %698 = vmax.xlane.f32.xlu0 %v697
        %v699 = vpop.xlane.xlu0 %698
        %v700 = vsel %vm657, %v655, -inf
        %701 = vmax.xlane.f32.xlu0 %v700
        %v702 = vpop.xlane.xlu0 %701
        %v703 = vsel %vm657, %v656, -inf
        %704 = vmax.xlane.f32.xlu0 %v703
        %v705 = vpop.xlane.xlu0 %704
        %v706 = vsub.f32 %v641, %v660
        %v707 = vsub.f32 %v642, %v663
        %v708 = vsub.f32 %v643, %v666
        %v709 = vsub.f32 %v644, %v669
        %v710 = vsub.f32 %v645, %v672
        %v711 = vsub.f32 %v646, %v675
        %v712 = vsub.f32 %v647, %v678
        %v713 = vsub.f32 %v648, %v681
        %v714 = vsub.f32 %v649, %v684
        %v715 = vsub.f32 %v650, %v687
        %v716 = vsub.f32 %v651, %v690
        %v717 = vsub.f32 %v652, %v693
        %v718 = vsub.f32 %v653, %v696
        %v719 = vsub.f32 %v654, %v699
        %v720 = vsub.f32 %v655, %v702
        %v721 = vsub.f32 %v656, %v705
        %v722 = vmul.f32 %v706, 1.442695
        %v723 = vpow.pop %v722
        %v724 = vmul.f32 %v707, 1.442695
        %v725 = vpow.pop %v724
        %v726 = vmul.f32 %v708, 1.442695
        %v727 = vpow.pop %v726
        %v728 = vmul.f32 %v709, 1.442695
        %v729 = vpow.pop %v728
        %v730 = vmul.f32 %v710, 1.442695
        %v731 = vpow.pop %v730
        %v732 = vmul.f32 %v711, 1.442695
        %v733 = vpow.pop %v732
        %v734 = vmul.f32 %v712, 1.442695
        %v735 = vpow.pop %v734
        %v736 = vmul.f32 %v713, 1.442695
        %v737 = vpow.pop %v736
        %v738 = vmul.f32 %v714, 1.442695
        %v739 = vpow.pop %v738
        %v740 = vmul.f32 %v715, 1.442695
        %v741 = vpow.pop %v740
        %v742 = vmul.f32 %v716, 1.442695
        %v743 = vpow.pop %v742
        %v744 = vmul.f32 %v717, 1.442695
        %v745 = vpow.pop %v744
        %v746 = vmul.f32 %v718, 1.442695
        %v747 = vpow.pop %v746
        %v748 = vmul.f32 %v719, 1.442695
        %v749 = vpow.pop %v748
        %v750 = vmul.f32 %v720, 1.442695
        %v751 = vpow.pop %v750
        %v752 = vmul.f32 %v721, 1.442695
        %v753 = vpow.pop %v752
        %v754 = vsel %vm657, %v723, 0.0
        %755 = vadd.xlane.f32.xlu0 %v754
        %v756 = vpop.xlane.xlu0 %755
        %v757 = vsel %vm657, %v725, 0.0
        %758 = vadd.xlane.f32.xlu0 %v757
        %v759 = vpop.xlane.xlu0 %758
        %v760 = vsel %vm657, %v727, 0.0
        %761 = vadd.xlane.f32.xlu0 %v760
        %v762 = vpop.xlane.xlu0 %761
        %v763 = vsel %vm657, %v729, 0.0
        %764 = vadd.xlane.f32.xlu0 %v763
        %v765 = vpop.xlane.xlu0 %764
        %v766 = vsel %vm657, %v731, 0.0
        %767 = vadd.xlane.f32.xlu0 %v766
        %v768 = vpop.xlane.xlu0 %767
        %v769 = vsel %vm657, %v733, 0.0
        %770 = vadd.xlane.f32.xlu0 %v769
        %v771 = vpop.xlane.xlu0 %770
        %v772 = vsel %vm657, %v735, 0.0
        %773 = vadd.xlane.f32.xlu0 %v772
        %v774 = vpop.xlane.xlu0 %773
        %v775 = vsel %vm657, %v737, 0.0
        %776 = vadd.xlane.f32.xlu0 %v775
        %v777 = vpop.xlane.xlu0 %776
        %v778 = vsel %vm657, %v739, 0.0
        %779 = vadd.xlane.f32.xlu0 %v778
        %v780 = vpop.xlane.xlu0 %779
        %v781 = vsel %vm657, %v741, 0.0
        %782 = vadd.xlane.f32.xlu0 %v781
        %v783 = vpop.xlane.xlu0 %782
        %v784 = vsel %vm657, %v743, 0.0
        %785 = vadd.xlane.f32.xlu0 %v784
        %v786 = vpop.xlane.xlu0 %785
        %v787 = vsel %vm657, %v745, 0.0
        %788 = vadd.xlane.f32.xlu0 %v787
        %v789 = vpop.xlane.xlu0 %788
        %v790 = vsel %vm657, %v747, 0.0
        %791 = vadd.xlane.f32.xlu0 %v790
        %v792 = vpop.xlane.xlu0 %791
        %v793 = vsel %vm657, %v749, 0.0
        %794 = vadd.xlane.f32.xlu0 %v793
        %v795 = vpop.xlane.xlu0 %794
        %v796 = vsel %vm657, %v751, 0.0
        %797 = vadd.xlane.f32.xlu0 %v796
        %v798 = vpop.xlane.xlu0 %797
        %v799 = vsel %vm657, %v753, 0.0
        %800 = vadd.xlane.f32.xlu0 %v799
        %v801 = vpop.xlane.xlu0 %800
        %v802 = vrcp.pop %v756
        %v803 = vmul.f32 %v723, %v802
        %v804 = vrcp.pop %v759
        %v805 = vmul.f32 %v725, %v804
        %v806 = vrcp.pop %v762
        %v807 = vmul.f32 %v727, %v806
        %v808 = vrcp.pop %v765
        %v809 = vmul.f32 %v729, %v808
        %v810 = vrcp.pop %v768
        %v811 = vmul.f32 %v731, %v810
        %v812 = vrcp.pop %v771
        %v813 = vmul.f32 %v733, %v812
        %v814 = vrcp.pop %v774
        %v815 = vmul.f32 %v735, %v814
        %v816 = vrcp.pop %v777
        %v817 = vmul.f32 %v737, %v816
        %v818 = vrcp.pop %v780
        %v819 = vmul.f32 %v739, %v818
        %v820 = vrcp.pop %v783
        %v821 = vmul.f32 %v741, %v820
        %v822 = vrcp.pop %v786
        %v823 = vmul.f32 %v743, %v822
        %v824 = vrcp.pop %v789
        %v825 = vmul.f32 %v745, %v824
        %v826 = vrcp.pop %v792
        %v827 = vmul.f32 %v747, %v826
        %v828 = vrcp.pop %v795
        %v829 = vmul.f32 %v749, %v828
        %v830 = vrcp.pop %v798
        %v831 = vmul.f32 %v751, %v830
        %v832 = vrcp.pop %v801
        %v833 = vmul.f32 %v753, %v832
        %v834 = vld [vmem:[%s316] sm:$0xff]
        %v835 = vld [vmem:[%s316 + $0x8] sm:$0xff]
        %v836 = vld [vmem:[%s316 + $0x10] sm:$0xff]
        %v837 = vld [vmem:[%s316 + $0x18] sm:$0xff]
        %v838 = vld [vmem:[%s316 + $0x20] sm:$0xff]
        %v839 = vld [vmem:[%s316 + $0x28] sm:$0xff]
        %v840 = vld [vmem:[%s316 + $0x30] sm:$0xff]
        %v841 = vld [vmem:[%s316 + $0x38] sm:$0xff]
        %v842 = vld [vmem:[%s316 + $0x40] sm:$0xff]
        %v843 = vld [vmem:[%s316 + $0x48] sm:$0xff]
        %v844 = vld [vmem:[%s316 + $0x50] sm:$0xff]
        %v845 = vld [vmem:[%s316 + $0x58] sm:$0xff]
        %v846 = vld [vmem:[%s316 + $0x60] sm:$0xff]
        %v847 = vld [vmem:[%s316 + $0x68] sm:$0xff]
        %v848 = vld [vmem:[%s316 + $0x70] sm:$0xff]
        %v849 = vld [vmem:[%s316 + $0x78] sm:$0xff]
        %v850 = vmul.f32 %v803, %v834
        %v851 = vmul.f32 %v805, %v835
        %v852 = vmul.f32 %v807, %v836
        %v853 = vmul.f32 %v809, %v837
        %v854 = vmul.f32 %v811, %v838
        %v855 = vmul.f32 %v813, %v839
        %v856 = vmul.f32 %v815, %v840
        %v857 = vmul.f32 %v817, %v841
        %v858 = vmul.f32 %v819, %v842
        %v859 = vmul.f32 %v821, %v843
        %v860 = vmul.f32 %v823, %v844
        %v861 = vmul.f32 %v825, %v845
        %v862 = vmul.f32 %v827, %v846
        %v863 = vmul.f32 %v829, %v847
        %v864 = vmul.f32 %v831, %v848
        %v865 = vmul.f32 %v833, %v849
        %v866 = vld [vmem:[%s2] sm:$0xff]
        %v868 = vsel %vm657, %v850, 0
        %v871 = vsel %vm657, %v851, 0
        %v874 = vsel %vm657, %v852, 0
        %v877 = vsel %vm657, %v853, 0
        %v880 = vsel %vm657, %v854, 0
        %v883 = vsel %vm657, %v855, 0
        %v886 = vsel %vm657, %v856, 0
        %v889 = vsel %vm657, %v857, 0
        %v892 = vsel %vm657, %v858, 0
        %v895 = vsel %vm657, %v859, 0
        %v898 = vsel %vm657, %v860, 0
        %v901 = vsel %vm657, %v861, 0
        %v904 = vsel %vm657, %v862, 0
        %v907 = vsel %vm657, %v863, 0
        %v910 = vsel %vm657, %v864, 0
        %v913 = vsel %vm657, %v865, 0
        %915 = vmatprep.subr.mxu0 0.0
        %916 = vmatpush1.msra.mxu0 0.0
        %917 = vmatprep.subr.mxu0 0.0
        %918 = vmatpush1.msra.mxu0 0.0
        %919 = vmatprep.subr.mxu0 0.0
        %920 = vmatpush1.msra.mxu0 0.0
        %921 = vmatprep.subr.mxu0 0.0
        %922 = vmatpush1.msra.mxu0 0.0
        %923 = vmatprep.subr.mxu0 0.0
        %924 = vmatpush1.msra.mxu0 0.0
        %925 = vmatprep.subr.mxu0 0.0
        %926 = vmatpush1.msra.mxu0 0.0
        %927 = vmatprep.subr.mxu0 0.0
        %928 = vmatpush1.msra.mxu0 0.0
        %929 = vmatprep.subr.mxu0 0.0
        %930 = vmatpush1.msra.mxu0 0.0
        %931 = vmatprep.subr.mxu0 0.0
        %932 = vmatpush1.msra.mxu0 0.0
        %933 = vmatprep.subr.mxu0 0.0
        %934 = vmatpush1.msra.mxu0 0.0
        %935 = vmatprep.subr.mxu0 0.0
        %936 = vmatpush1.msra.mxu0 0.0
        %937 = vmatprep.subr.mxu0 0.0
        %938 = vmatpush1.msra.mxu0 0.0
        %939 = vmatprep.subr.mxu0 0.0
        %940 = vmatpush1.msra.mxu0 0.0
        %941 = vmatprep.subr.mxu0 0.0
        %942 = vmatpush1.msra.mxu0 0.0
        %943 = vmatprep.subr.mxu0 0.0
        %944 = vmatpush1.msra.mxu0 0.0
        %945 = vmatprep.subr.mxu0 0.0
        %946 = vmatpush1.msra.mxu0 %v866
        %947 = vmatprep.subr.mxu0 0.0
        %948 = vmatpush2.msra.mxu0 0.0
        %949 = vmatprep.subr.mxu0 0.0
        %950 = vmatpush2.msra.mxu0 0.0
        %951 = vmatprep.subr.mxu0 0.0
        %952 = vmatpush2.msra.mxu0 0.0
        %953 = vmatprep.subr.mxu0 0.0
        %954 = vmatpush2.msra.mxu0 0.0
        %955 = vmatprep.subr.mxu0 0.0
        %956 = vmatpush2.msra.mxu0 0.0
        %957 = vmatprep.subr.mxu0 0.0
        %958 = vmatpush2.msra.mxu0 0.0
        %959 = vmatprep.subr.mxu0 0.0
        %960 = vmatpush2.msra.mxu0 0.0
        %961 = vmatprep.subr.mxu0 0.0
        %962 = vmatpush2.msra.mxu0 0.0
        %963 = vmatprep.subr.mxu0 0.0
        %964 = vmatpush2.msra.mxu0 0.0
        %965 = vmatprep.subr.mxu0 0.0
        %966 = vmatpush2.msra.mxu0 0.0
        %967 = vmatprep.subr.mxu0 0.0
        %968 = vmatpush2.msra.mxu0 0.0
        %969 = vmatprep.subr.mxu0 0.0
        %970 = vmatpush2.msra.mxu0 0.0
        %971 = vmatprep.subr.mxu0 0.0
        %972 = vmatpush2.msra.mxu0 0.0
        %973 = vmatprep.subr.mxu0 0.0
        %974 = vmatpush2.msra.mxu0 0.0
        %975 = vmatprep.subr.mxu0 0.0
        %976 = vmatpush2.msra.mxu0 0.0
        %977 = vmatprep.subr.mxu0 0.0
        %978 = vmatpush2.msra.mxu0 0.0
        %979 = vmatprep.mubr.f32.mxu0 0.0
        %980 = vmatmul.mubr.f32.gmra.mxu0 %v868
        %v981 = vpop.f32.mrf.mxu0
        %v982 = vadd.f32 0.0, %v981
        %v983 = vpop.f32.mrf.mxu0
        %984 = vmatprep.mubr.f32.mxu0 0.0
        %985 = vmatmul.mubr.f32.gmra.mxu0 %v871
        %v986 = vpop.f32.mrf.mxu0
        %v987 = vadd.f32 0.0, %v986
        %v988 = vpop.f32.mrf.mxu0
        %989 = vmatprep.mubr.f32.mxu0 0.0
        %990 = vmatmul.mubr.f32.gmra.mxu0 %v874
        %v991 = vpop.f32.mrf.mxu0
        %v992 = vadd.f32 0.0, %v991
        %v993 = vpop.f32.mrf.mxu0
        %994 = vmatprep.mubr.f32.mxu0 0.0
        %995 = vmatmul.mubr.f32.gmra.mxu0 %v877
        %v996 = vpop.f32.mrf.mxu0
        %v997 = vadd.f32 0.0, %v996
        %v998 = vpop.f32.mrf.mxu0
        %999 = vmatprep.mubr.f32.mxu0 0.0
        %1000 = vmatmul.mubr.f32.gmra.mxu0 %v880
        %v1001 = vpop.f32.mrf.mxu0
        %v1002 = vadd.f32 0.0, %v1001
        %v1003 = vpop.f32.mrf.mxu0
        %1004 = vmatprep.mubr.f32.mxu0 0.0
        %1005 = vmatmul.mubr.f32.gmra.mxu0 %v883
        %v1006 = vpop.f32.mrf.mxu0
        %v1007 = vadd.f32 0.0, %v1006
        %v1008 = vpop.f32.mrf.mxu0
        %1009 = vmatprep.mubr.f32.mxu0 0.0
        %1010 = vmatmul.mubr.f32.gmra.mxu0 %v886
        %v1011 = vpop.f32.mrf.mxu0
        %v1012 = vadd.f32 0.0, %v1011
        %v1013 = vpop.f32.mrf.mxu0
        %1014 = vmatprep.mubr.f32.mxu0 0.0
        %1015 = vmatmul.mubr.f32.gmra.mxu0 %v889
        %v1016 = vpop.f32.mrf.mxu0
        %v1017 = vadd.f32 0.0, %v1016
        %v1018 = vpop.f32.mrf.mxu0
        %1019 = vmatprep.mubr.f32.mxu0 0.0
        %1020 = vmatmul.mubr.f32.gmra.mxu0 %v892
        %v1021 = vpop.f32.mrf.mxu0
        %v1022 = vadd.f32 0.0, %v1021
        %v1023 = vpop.f32.mrf.mxu0
        %1024 = vmatprep.mubr.f32.mxu0 0.0
        %1025 = vmatmul.mubr.f32.gmra.mxu0 %v895
        %v1026 = vpop.f32.mrf.mxu0
        %v1027 = vadd.f32 0.0, %v1026
        %v1028 = vpop.f32.mrf.mxu0
        %1029 = vmatprep.mubr.f32.mxu0 0.0
        %1030 = vmatmul.mubr.f32.gmra.mxu0 %v898
        %v1031 = vpop.f32.mrf.mxu0
        %v1032 = vadd.f32 0.0, %v1031
        %v1033 = vpop.f32.mrf.mxu0
        %1034 = vmatprep.mubr.f32.mxu0 0.0
        %1035 = vmatmul.mubr.f32.gmra.mxu0 %v901
        %v1036 = vpop.f32.mrf.mxu0
        %v1037 = vadd.f32 0.0, %v1036
        %v1038 = vpop.f32.mrf.mxu0
        %1039 = vmatprep.mubr.f32.mxu0 0.0
        %1040 = vmatmul.mubr.f32.gmra.mxu0 %v904
        %v1041 = vpop.f32.mrf.mxu0
        %v1042 = vadd.f32 0.0, %v1041
        %v1043 = vpop.f32.mrf.mxu0
        %1044 = vmatprep.mubr.f32.mxu0 0.0
        %1045 = vmatmul.mubr.f32.gmra.mxu0 %v907
        %v1046 = vpop.f32.mrf.mxu0
        %v1047 = vadd.f32 0.0, %v1046
        %v1048 = vpop.f32.mrf.mxu0
        %1049 = vmatprep.mubr.f32.mxu0 0.0
        %1050 = vmatmul.mubr.f32.gmra.mxu0 %v910
        %v1051 = vpop.f32.mrf.mxu0
        %v1052 = vadd.f32 0.0, %v1051
        %v1053 = vpop.f32.mrf.mxu0
        %1054 = vmatprep.mubr.f32.mxu0 0.0
        %1055 = vmatmul.mubr.f32.gmra.mxu0 %v913
        %v1056 = vpop.f32.mrf.mxu0
        %v1057 = vadd.f32 0.0, %v1056
        %v1058 = vpop.f32.mrf.mxu0
        %1059 = vdwg.mxu0
        %1060 = vst [vmem:[%s293] sm:$0xff] %v982
        %1061 = vst [vmem:[%s293 + $0x8] sm:$0xff] %v987
        %1062 = vst [vmem:[%s293 + $0x10] sm:$0xff] %v992
        %1063 = vst [vmem:[%s293 + $0x18] sm:$0xff] %v997
        %1064 = vst [vmem:[%s293 + $0x20] sm:$0xff] %v1002
        %1065 = vst [vmem:[%s293 + $0x28] sm:$0xff] %v1007
        %1066 = vst [vmem:[%s293 + $0x30] sm:$0xff] %v1012
        %1067 = vst [vmem:[%s293 + $0x38] sm:$0xff] %v1017
        %1068 = vst [vmem:[%s293 + $0x40] sm:$0xff] %v1022
        %1069 = vst [vmem:[%s293 + $0x48] sm:$0xff] %v1027
        %1070 = vst [vmem:[%s293 + $0x50] sm:$0xff] %v1032
        %1071 = vst [vmem:[%s293 + $0x58] sm:$0xff] %v1037
        %1072 = vst [vmem:[%s293 + $0x60] sm:$0xff] %v1042
        %1073 = vst [vmem:[%s293 + $0x68] sm:$0xff] %v1047
        %1074 = vst [vmem:[%s293 + $0x70] sm:$0xff] %v1052
        %1075 = vst [vmem:[%s293 + $0x78] sm:$0xff] %v1057
        %s1076 = sand.u32 %s174, 1
        %s1077 = scalar_lea.sflag [#allocation3], %s1076
        %s1078 = sand.u32 %s174, 1
        %s1079 = smul.addr %s1078, 128
        %s1080 = scalar_lea.vmem [#allocation2], %s1079
        // Predicated region
        $region45: #{model_forward.1} parent=43 // pred_check
          %p1081 = pneg %p184
        $region46: #{model_forward.1} parent=43 // pred_check_branch
          %1083 = sbr.rel (%p1081) target = $region48
        $region47: #{model_forward.1} parent=43 // pred_region
          %s1084 = smul.u32 16, %s20
          %s1086 = ssub.s32 2048, 2048
          %1087 = vsyncadd %s1077, %s1086
          %s1088 = smul.addr %s1084, 128
          %s1089 = scalar_lea.hbm %s6, %s1088
          %s1090 = sshll.u32 %s1080, 4
          %s1091 = int_to_ptr.vmem [resolvable:$true] %s1090
          %1096 = dma.vmem_to_hbm [thread:$0]  %s1091, 2048, %s1089, %s1077, 128, 128, 8
        $region48: #{model_forward.1} parent=43 // pred_fallthru
          _
      $region44: #{model_forward.1} parent=5 // pred_fallthru
        _
      %p1097 = scmp.le.s32.totalorder 2, %s15
      // Predicated region
      $region49: #{model_forward.1} parent=5 // pred_check
        %p1098 = pneg %p1097
      $region50: #{model_forward.1} parent=5 // pred_check_branch
        %1100 = sbr.rel (%p1098) target = $region52
      $region51: #{model_forward.1} parent=5 // pred_region
        %s1101 = ssub.s32 %s15, 2
        // Predicated region
        $region53: #{model_forward.1} parent=51 // pred_check
          %p1102 = pneg %p190
        $region54: #{model_forward.1} parent=51 // pred_check_branch
          %1104 = sbr.rel (%p1102) target = $region56
        $region55: #{model_forward.1} parent=51 // pred_region
          %s1105 = sand.u32 %s175, 1
          %s1106 = scalar_lea.sflag [#allocation3], %s1105
          %s1107 = sand.u32 %s175, 1
          %s1108 = smul.addr %s1107, 128
          %s1109 = scalar_lea.vmem [#allocation2], %s1108
          %1110 = dma.done %s1106, 2048
        $region56: #{model_forward.1} parent=51 // pred_fallthru
          _
      $region52: #{model_forward.1} parent=5 // pred_fallthru
        _
    $region6: #{model_forward.1} parent=1 // loop_footer
      %s19 = sadd.s32 1, %s15
    $region7: #{model_forward.1} parent=1 // loop_footer_branch
      %14 = sbr.rel target = $region3
    $region8: #{model_forward.1} parent=1 // loop_exit
      _
    %1111 = vsyncpa [#allocation3], 1
    %s1112 = scalar_lea.sflag [#allocation3], 1
    %1113 = vsyncpa %s1112, 1

</llo_original>
